<compile_context>
chip_gen: v5e
topology: v5e:2x2
jax: 0.10.0
libtpu: 0.0.40
codegen_flags: <defaults>
</compile_context>

<pallas_src>
import functools
import math

import jax
import jax.numpy as jnp
import numpy as np
from jax.experimental import pallas as pl
from jax.experimental.pallas import tpu as pltpu


def _round_up(x, m):
    return (x + m - 1) // m * m


def _arc_margin_kernel(k, x_ref, w_ref, o_ref):
    """x_ref: (tB, F) pre-normalized compute dtype,
    w_ref: (k, F, tOF) pre-normalized compute dtype,
    o_ref: (tB, tOF) out dtype."""
    x = x_ref[...]
    # k subcenter cosines: (tB, F) . (F, tOF) -> (tB, tOF) with f32 accumulation,
    # folded with an elementwise running max. k is small & static -> unrolled.
    out = None
    for j in range(k):
        cj = jax.lax.dot_general(
            x, w_ref[j],
            dimension_numbers=(((1,), (0,)), ((), ())),
            preferred_element_type=jnp.float32,
        )
        out = cj if out is None else jnp.maximum(out, cj)
    o_ref[...] = out.astype(o_ref.dtype)


class ArcMarginProductSubcenterTPU:
    """Holds the (once-)preprocessed weight and runs the Pallas forward."""

    def __init__(self, weight, *, out_features, k, tile_b=512, tile_of=1024,
                 compute_dtype=jnp.bfloat16, out_dtype=jnp.float32,
                 vmem_budget_bytes=40 * 1024 * 1024):
        OFk, in_features = weight.shape
        assert OFk == out_features * k
        self.out_features = out_features
        self.k = k
        self.in_features = in_features
        self.compute_dtype = compute_dtype
        self.out_dtype = out_dtype
        self.tile_b = tile_b
        self.vmem_budget_bytes = vmem_budget_bytes

        # ---- one-time weight preprocessing (cached across forward calls) ----
        eps = jnp.float32(1e-12)  # matches F.normalize default (clamp on the norm)
        w32 = weight.astype(jnp.float32)
        sumsq = jnp.sum(w32 * w32, axis=-1, keepdims=True)
        wn = w32 * jax.lax.rsqrt(jnp.maximum(sumsq, eps * eps))   # (OF*k, F) f32
        # weight row c*k + j  ->  class c, subcenter j
        wn = wn.reshape(out_features, k, in_features)             # (OF, k, F)

        tOF = min(tile_of, _round_up(out_features, 128))
        OF_pad = _round_up(out_features, tOF)
        wn = jnp.pad(wn, ((0, OF_pad - out_features), (0, 0), (0, 0)))
        # (k, F, OF_pad): OF on lanes -> lane-dense, MXU-native output layout.
        w_t = wn.transpose(1, 2, 0).astype(compute_dtype)
        self.w_t = jax.block_until_ready(jnp.asarray(w_t))
        self.tOF = tOF
        self.OF_pad = OF_pad

    def __call__(self, features):
        B, F = features.shape
        assert F == self.in_features
        k, tOF, OF_pad = self.k, self.tOF, self.OF_pad

        # ---- feature L2-normalization hoisted out of the kernel -------------
        eps = jnp.float32(1e-12)
        x = features.astype(jnp.float32)
        sumsq = jnp.sum(x * x, axis=-1, keepdims=True)
        xn = (x * jax.lax.rsqrt(jnp.maximum(sumsq, eps * eps))).astype(
            self.compute_dtype)

        # ---- tile selection + VMEM-budget clamp ------------------------------
        x_bytes = np.dtype(self.compute_dtype).itemsize
        w_bytes = np.dtype(self.compute_dtype).itemsize
        o_bytes = np.dtype(self.out_dtype).itemsize

        tB = min(self.tile_b, _round_up(B, 8))

        def vmem_use(tb):
            # double-buffered x tile + weight tile + out tile
            return (2 * tb * F * x_bytes
                    + 2 * k * F * tOF * w_bytes
                    + 2 * tb * tOF * o_bytes)

        while tB > 8 and vmem_use(tB) > self.vmem_budget_bytes:
            tB = max(8, _round_up(tB // 2, 8))

        B_pad = _round_up(B, tB)
        xn = jnp.pad(xn, ((0, B_pad - B), (0, 0)))

        # OF outer, B inner: weight tile constant across the inner B loop
        # (streamed from HBM exactly once); x tile is the one re-read.
        grid = (OF_pad // tOF, B_pad // tB)

        kernel = functools.partial(_arc_margin_kernel, k)
        cost = pl.CostEstimate(
            flops=2 * B_pad * OF_pad * k * F,
            transcendentals=0,
            bytes_accessed=(k * F * OF_pad * w_bytes          # weight: once
                            + grid[0] * B_pad * F * x_bytes   # x: once per OF tile
                            + B_pad * OF_pad * o_bytes),      # output writeback
        )

        out = pl.pallas_call(
            kernel,
            out_shape=jax.ShapeDtypeStruct((B_pad, OF_pad), self.out_dtype),
            grid=grid,
            in_specs=[
                # Feature tile: block index depends only on the inner (B) axis.
                pl.BlockSpec((tB, F), lambda j, i: (i, 0)),
                # Weight tile: depends only on the outer (OF) axis -> single
                # streaming pass, and OF is the axis sharded across TCs (v7x).
                pl.BlockSpec((k, F, tOF), lambda j, i: (0, 0, j)),
            ],
            out_specs=pl.BlockSpec((tB, tOF), lambda j, i: (i, j)),
            compiler_params=pltpu.CompilerParams(
                dimension_semantics=("parallel", "parallel"),
                vmem_limit_bytes=48 * 1024 * 1024,
            ),
            cost_estimate=cost,
        )(xn, self.w_t)

        return out[:B, :self.out_features]


def _reference(features, weight, *, out_features, k):
    eps = 1e-12
    xn = features / jnp.maximum(
        jnp.linalg.norm(features, axis=-1, keepdims=True), eps)
    wn = weight / jnp.maximum(
        jnp.linalg.norm(weight, axis=-1, keepdims=True), eps)
    cos_all = xn @ wn.T
    return jnp.max(cos_all.reshape(-1, out_features, k), axis=2)


if __name__ == "__main__":
    # Small shapes consistent with the module's forward.
    B, in_features, out_features, k = 8, 32, 16, 3

    key = jax.random.PRNGKey(0)
    k_x, k_w = jax.random.split(key)

    features = jax.random.normal(k_x, (B, in_features), dtype=jnp.float32)

    # Deterministic init matching reset_parameters: uniform(-stdv, stdv),
    # stdv = 1/sqrt(in_features).
    stdv = 1.0 / math.sqrt(in_features)
    weight = jax.random.uniform(
        k_w, (out_features * k, in_features),
        minval=-stdv, maxval=stdv, dtype=jnp.float32)

    module = ArcMarginProductSubcenterTPU(
        weight, out_features=out_features, k=k)     # weight prepped once here
    out = module(features)
    out = jax.block_until_ready(out)

    ref = _reference(features, weight, out_features=out_features, k=k)
    # bf16 MXU operands (f32 accumulation) -> loosened tolerance vs f32 reference.
    np.testing.assert_allclose(np.asarray(out), np.asarray(ref),
                               rtol=2e-2, atol=2e-2)

    print("KERNEL_OK")
</pallas_src>

<mosaic_0001>
module attributes {stable_mosaic.version = 11 : i64} {
  func.func @_arc_margin_kernel(%arg0: i32, %arg1: i32, %arg2: memref<8x32xbf16, #tpu.memory_space<vmem>>, %arg3: memref<3x32x128xbf16, #tpu.memory_space<vmem>>, %arg4: memref<8x128xf32, #tpu.memory_space<vmem>>) attributes {dimension_semantics = [#tpu.dimension_semantics<parallel>, #tpu.dimension_semantics<parallel>], iteration_bounds = array<i64: 1, 1>, scalar_prefetch = 0 : i64, scratch_operands = 0 : i64, tpu.core_type = #tpu.core_type<tc>, window_params = [{transform_indices = @transform_0, window_bounds = array<i64: 8, 32>}, {transform_indices = @transform_1, window_bounds = array<i64: 3, 32, 128>}, {transform_indices = @transform_2, window_bounds = array<i64: 8, 128>}]} {
    %c0 = arith.constant 0 : index
    %c0_0 = arith.constant 0 : index
    %0 = vector.load %arg2[%c0, %c0_0] : memref<8x32xbf16, #tpu.memory_space<vmem>>, vector<8x32xbf16>
    %c0_1 = arith.constant 0 : index
    %c0_2 = arith.constant 0 : index
    %c0_3 = arith.constant 0 : index
    %1 = vector.load %arg3[%c0_1, %c0_2, %c0_3] : memref<3x32x128xbf16, #tpu.memory_space<vmem>>, vector<1x32x128xbf16>
    %2 = vector.shape_cast %1 : vector<1x32x128xbf16> to vector<32x128xbf16>
    %cst = arith.constant dense<0.000000e+00> : vector<8x128xf32>
    %3 = tpu.matmul %0, %2, %cst {dimension_numbers = #tpu.dot_dimension_numbers<[1], [0], [0], [1], [0, 0, 1, 1], [], []>} : vector<8x32xbf16>, vector<32x128xbf16>, vector<8x128xf32> -> vector<8x128xf32>
    %c1 = arith.constant 1 : index
    %c0_4 = arith.constant 0 : index
    %c0_5 = arith.constant 0 : index
    %4 = vector.load %arg3[%c1, %c0_4, %c0_5] : memref<3x32x128xbf16, #tpu.memory_space<vmem>>, vector<1x32x128xbf16>
    %5 = vector.shape_cast %4 : vector<1x32x128xbf16> to vector<32x128xbf16>
    %cst_6 = arith.constant dense<0.000000e+00> : vector<8x128xf32>
    %6 = tpu.matmul %0, %5, %cst_6 {dimension_numbers = #tpu.dot_dimension_numbers<[1], [0], [0], [1], [0, 0, 1, 1], [], []>} : vector<8x32xbf16>, vector<32x128xbf16>, vector<8x128xf32> -> vector<8x128xf32>
    %7 = arith.maximumf %3, %6 : vector<8x128xf32>
    %c2 = arith.constant 2 : index
    %c0_7 = arith.constant 0 : index
    %c0_8 = arith.constant 0 : index
    %8 = vector.load %arg3[%c2, %c0_7, %c0_8] : memref<3x32x128xbf16, #tpu.memory_space<vmem>>, vector<1x32x128xbf16>
    %9 = vector.shape_cast %8 : vector<1x32x128xbf16> to vector<32x128xbf16>
    %cst_9 = arith.constant dense<0.000000e+00> : vector<8x128xf32>
    %10 = tpu.matmul %0, %9, %cst_9 {dimension_numbers = #tpu.dot_dimension_numbers<[1], [0], [0], [1], [0, 0, 1, 1], [], []>} : vector<8x32xbf16>, vector<32x128xbf16>, vector<8x128xf32> -> vector<8x128xf32>
    %11 = arith.maximumf %7, %10 : vector<8x128xf32>
    %c0_10 = arith.constant 0 : index
    %c0_11 = arith.constant 0 : index
    %12 = vector.load %arg4[%c0_10, %c0_11] : memref<8x128xf32, #tpu.memory_space<vmem>>, vector<8x128xf32>
    tpu.vector_store %arg4[%c0_10, %c0_11], %11 {strides = array<i32>} : memref<8x128xf32, #tpu.memory_space<vmem>>, vector<8x128xf32>,
    return
  }
  func.func @transform_0(%arg0: i32, %arg1: i32) -> (i32, i32) {
    %c0_i32 = arith.constant 0 : i32
    %c0_i32_0 = arith.constant 0 : i32
    return %arg1, %c0_i32 : i32, i32
  }
  func.func @transform_1(%arg0: i32, %arg1: i32) -> (i32, i32, i32) {
    %c0_i32 = arith.constant 0 : i32
    %c0_i32_0 = arith.constant 0 : i32
    %c0_i32_1 = arith.constant 0 : i32
    return %c0_i32, %c0_i32_0, %arg0 : i32, i32, i32
  }
  func.func @transform_2(%arg0: i32, %arg1: i32) -> (i32, i32) {
    %c0_i32 = arith.constant 0 : i32
    return %arg1, %arg0 : i32, i32
  }
}

</mosaic_0001>

<llo_original>
// kernel: tpu_custom_call.1
$region0: #{tpu_custom_call.1}
  #allocation0 [shape = 'u32[]', space=smem, size = 0x4, offset = 0x4, fixed_abs, tag = 'smem constant byte address 0x4 - core index']
  #allocation1 [shape = 'u32[72,128]{1,0:T(1,128)}', space=vmem, size = 0x9000, scoped, tag = 'internal scratch']
  %s0 = inlined_call_operand.hbm [shape: bf16[8,32], index: 0, kind: input, shape index: {}]
  %s1 = inlined_call_operand.hbm [shape: bf16[3,32,128], index: 1, kind: input, shape index: {}]
  %s2 = inlined_call_operand.hbm [shape: f32[8,128], index: 2, kind: output, shape index: {}]
  %s3 = sld [smem:[#allocation0]]
  $region26: #{tpu_custom_call.1} parent=0
    _
  %s5 = ssub.s32 1, %s3
  %s6 = scalar_select 0, %s5, %s3
  $region1: #{tpu_custom_call.1} parent=0
    #allocation2 [shape = 'u8[2048]{0}', space=vmem, size = 0x800, scoped, tag = 'input window, operand 0, single buffered']
    #allocation3 [shape = 's32[1]{0}', space=sflag, size = 0x4, scoped, tag = 'scoped memory for tpu_custom_call.1']
    #allocation4 [shape = 's32[1]{0}', space=sflag, size = 0x4, scoped, tag = 'scoped memory for tpu_custom_call.1']
    #allocation5 [shape = 'u8[24576]{0}', space=vmem, size = 0x6000, scoped, tag = 'input window, operand 1, single buffered']
    #allocation6 [shape = 's32[1]{0}', space=sflag, size = 0x4, scoped, tag = 'scoped memory for tpu_custom_call.1']
    #allocation7 [shape = 'u8[4096]{0}', space=vmem, size = 0x1000, scoped, tag = 'output window, operand 0, single buffered']
    %7 = vsyncpa [#allocation3], 0
    %8 = vsyncpa [#allocation6], 0
    %9 = vsyncpa [#allocation4], 0
    // Predicated region
    $region2: #{tpu_custom_call.1} parent=1 // pred_check
      _
    $region3: #{tpu_custom_call.1} parent=1 // pred_check_branch
      %11 = sbr.rel (0) target = $region5
    $region4: #{tpu_custom_call.1} parent=1 // pred_region
      %13 = vsyncadd [#allocation3], 0
      %s15 = sshll.u32 %s0, 4
      %s16 = int_to_ptr.hbm [resolvable:$true] %s15
      %s17 = sshll.u32 [#allocation2], 4
      %s18 = int_to_ptr.vmem [resolvable:$true] %s17
      %20 = dma.hbm_to_vmem [thread:$0]  %s16, 64, %s18, [#allocation3]
    $region5: #{tpu_custom_call.1} parent=1 // pred_fallthru
      _
    // Predicated region
    $region6: #{tpu_custom_call.1} parent=1 // pred_check
      _
    $region7: #{tpu_custom_call.1} parent=1 // pred_check_branch
      %22 = sbr.rel (0) target = $region9
    $region8: #{tpu_custom_call.1} parent=1 // pred_region
      %24 = vsyncadd [#allocation6], 0
      %s25 = sshll.u32 %s1, 4
      %s26 = int_to_ptr.hbm [resolvable:$true] %s25
      %s27 = sshll.u32 [#allocation5], 4
      %s28 = int_to_ptr.vmem [resolvable:$true] %s27
      %33 = dma.hbm_to_vmem [thread:$0]  %s26, 768, %s28, [#allocation6], 64, 64, 4
    $region9: #{tpu_custom_call.1} parent=1 // pred_fallthru
      _
    // Predicated region
    $region10: #{tpu_custom_call.1} parent=1 // pred_check
      _
    $region11: #{tpu_custom_call.1} parent=1 // pred_check_branch
      %35 = sbr.rel (0) target = $region13
    $region12: #{tpu_custom_call.1} parent=1 // pred_region
      %37 = dma.done [#allocation3], 64
    $region13: #{tpu_custom_call.1} parent=1 // pred_fallthru
      _
    // Predicated region
    $region14: #{tpu_custom_call.1} parent=1 // pred_check
      _
    $region15: #{tpu_custom_call.1} parent=1 // pred_check_branch
      %39 = sbr.rel (0) target = $region17
    $region16: #{tpu_custom_call.1} parent=1 // pred_region
      %41 = dma.done [#allocation6], 768
    $region17: #{tpu_custom_call.1} parent=1 // pred_fallthru
      _
    %v43 = vld [vmem:[#allocation2] sm:$0xf]
    %v44 = vld [vmem:[#allocation5] sm:$0xf]
    %v45 = vld [vmem:[#allocation5 + $0x4] sm:$0xf]
    %v46 = vld [vmem:[#allocation5 + $0x8] sm:$0xf]
    %v47 = vld [vmem:[#allocation5 + $0xc] sm:$0xf]
    %v52 = vunpack.c.l.b16 %v44
    %v53 = vunpack.c.l.b16 %v45
    %v54 = vunpack.c.l.b16 %v46
    %v55 = vunpack.c.l.b16 %v47
    %v56 = vpack.c.b16 %v53, %v52
    %v57 = vpack.c.b16 %v55, %v54
    %vm60 = vcmask 261120
    %v62 = vsel %vm60, %v43, 0
    %64 = vmatpush.bf16.msra.mxu0 0
    %65 = vmatpush.bf16.msra.mxu0 0
    %66 = vmatpush.bf16.msra.mxu0 0
    %67 = vmatpush.bf16.msra.mxu0 0
    %68 = vmatpush.bf16.msra.mxu0 0
    %69 = vmatpush.bf16.msra.mxu0 0
    %70 = vmatpush.bf16.msra.mxu0 %v57
    %71 = vmatpush.bf16.msra.mxu0 %v56
    %72 = vmatmul.bf16.gmra.mxu0 %v62
    %v73 = vpop.f32.mrf.mxu0
    %v74 = vadd.f32 0.0, %v73
    %v75 = vpop.f32.mrf.mxu0
    %76 = vdwg.mxu0
    %s77 = scalar_lea.vmem [#allocation5], 16
    %v78 = vld [vmem:[%s77] sm:$0xf]
    %v79 = vld [vmem:[%s77 + $0x4] sm:$0xf]
    %v80 = vld [vmem:[%s77 + $0x8] sm:$0xf]
    %v81 = vld [vmem:[%s77 + $0xc] sm:$0xf]
    %v86 = vunpack.c.l.b16 %v78
    %v87 = vunpack.c.l.b16 %v79
    %v88 = vunpack.c.l.b16 %v80
    %v89 = vunpack.c.l.b16 %v81
    %v90 = vpack.c.b16 %v87, %v86
    %v91 = vpack.c.b16 %v89, %v88
    %94 = vmatpush.bf16.msra.mxu0 0
    %95 = vmatpush.bf16.msra.mxu0 0
    %96 = vmatpush.bf16.msra.mxu0 0
    %97 = vmatpush.bf16.msra.mxu0 0
    %98 = vmatpush.bf16.msra.mxu0 0
    %99 = vmatpush.bf16.msra.mxu0 0
    %100 = vmatpush.bf16.msra.mxu0 %v91
    %101 = vmatpush.bf16.msra.mxu0 %v90
    %102 = vmatmul.bf16.gmra.mxu0 %v62
    %v103 = vpop.f32.mrf.mxu0
    %v104 = vadd.f32 0.0, %v103
    %v105 = vpop.f32.mrf.mxu0
    %106 = vdwg.mxu0
    %v107 = vmax.f32 %v74, %v104
    %s108 = scalar_lea.vmem [#allocation5], 32
    %v109 = vld [vmem:[%s108] sm:$0xf]
    %v110 = vld [vmem:[%s108 + $0x4] sm:$0xf]
    %v111 = vld [vmem:[%s108 + $0x8] sm:$0xf]
    %v112 = vld [vmem:[%s108 + $0xc] sm:$0xf]
    %v117 = vunpack.c.l.b16 %v109
    %v118 = vunpack.c.l.b16 %v110
    %v119 = vunpack.c.l.b16 %v111
    %v120 = vunpack.c.l.b16 %v112
    %v121 = vpack.c.b16 %v118, %v117
    %v122 = vpack.c.b16 %v120, %v119
    %125 = vmatpush.bf16.msra.mxu0 0
    %126 = vmatpush.bf16.msra.mxu0 0
    %127 = vmatpush.bf16.msra.mxu0 0
    %128 = vmatpush.bf16.msra.mxu0 0
    %129 = vmatpush.bf16.msra.mxu0 0
    %130 = vmatpush.bf16.msra.mxu0 0
    %131 = vmatpush.bf16.msra.mxu0 %v122
    %132 = vmatpush.bf16.msra.mxu0 %v121
    %133 = vmatmul.bf16.gmra.mxu0 %v62
    %v134 = vpop.f32.mrf.mxu0
    %v135 = vadd.f32 0.0, %v134
    %v136 = vpop.f32.mrf.mxu0
    %137 = vdwg.mxu0
    %v138 = vmax.f32 %v107, %v135
    %139 = vst [vmem:[#allocation7] sm:$0xff] %v138
    // Predicated region
    $region18: #{tpu_custom_call.1} parent=1 // pred_check
      _
    $region19: #{tpu_custom_call.1} parent=1 // pred_check_branch
      %141 = sbr.rel (0) target = $region21
    $region20: #{tpu_custom_call.1} parent=1 // pred_region
      %143 = vsyncadd [#allocation4], 0
      %s145 = sshll.u32 [#allocation7], 4
      %s146 = int_to_ptr.vmem [resolvable:$true] %s145
      %s147 = sshll.u32 %s2, 4
      %s148 = int_to_ptr.hbm [resolvable:$true] %s147
      %150 = dma.vmem_to_hbm [thread:$0]  %s146, 128, %s148, [#allocation4]
    $region21: #{tpu_custom_call.1} parent=1 // pred_fallthru
      _
    // Predicated region
    $region22: #{tpu_custom_call.1} parent=1 // pred_check
      _
    $region23: #{tpu_custom_call.1} parent=1 // pred_check_branch
      %152 = sbr.rel (0) target = $region25
    $region24: #{tpu_custom_call.1} parent=1 // pred_region
      %154 = dma.done [#allocation4], 128
    $region25: #{tpu_custom_call.1} parent=1 // pred_fallthru
      _
    %155 = vsyncpa [#allocation3], 1
    %156 = vsyncpa [#allocation6], 1
    %157 = vsyncpa [#allocation4], 1

</llo_original>
